<compile_context>
chip_gen: v6e
topology: v6e:2x2x1
jax: 0.10.0
libtpu: 0.0.40
codegen_flags: <defaults>
</compile_context>

<pallas_src>
import functools

import jax
import jax.numpy as jnp
from jax.experimental import pallas as pl
from jax.experimental.pallas import tpu as pltpu

_MASK_ROWS = 16  # 9 taps, padded to a sublane-friendly row count


def _edge_attention_kernel(w1_ref, w1s_ref, w2_ref, masks_ref, x_ref, o_ref,
                           *, C, H, W):
    """One grid step: TN images, each stored lane-dense as a flat (C*HW,) row.

    w1_ref   : SMEM (C*9,)        conv1 weight, flattened [c, tap]
    w1s_ref  : SMEM (9,)          per-tap channel-sum of conv1 weight
    w2_ref   : SMEM (2*9,)        conv2 weight, flattened [c, tap]
    masks_ref: VMEM (16, HW) f32  SAME-padding boundary masks (rows 0..8)
    x_ref    : VMEM (TN, C*HW) f32
    o_ref    : VMEM (TN, HW)   f32
    """
    TN = x_ref.shape[0]
    HW = H * W
    taps = [(dh, dw) for dh in (-1, 0, 1) for dw in (-1, 0, 1)]

    # ---- channel views: lane-aligned static slices of the flat slab --------
    xs = [x_ref[:, c * HW:(c + 1) * HW] for c in range(C)]

    # ---- channel mean (VPU adds only) ---------------------------------------
    avg = xs[0]
    for c in range(1, C):
        avg = avg + xs[c]
    avg = avg * jnp.float32(1.0 / C)

    # ---- grid-invariant boundary masks, loaded once as (1, HW) rows --------
    mrows = [None] * 9
    for k, (dh, dw) in enumerate(taps):
        if (dh, dw) != (0, 0):
            mrows[k] = masks_ref[k:k + 1, :]

    def shifted(a, k):
        # out[p] = a[p + dh*W + dw] if (h+dh, w+dw) is inside the image else 0.
        dh, dw = taps[k]
        off = dh * W + dw
        if off == 0:
            return a
        r = pltpu.roll(a, shift=(-off) % HW, axis=1)
        return r * mrows[k]

    # ---- conv1: Conv2d(C, 1, 3, padding=1, bias=False) on x_edge = x - avg --
    # Linearity: pre-weight per tap (sum_c x_c * w1[c,k] - avg * sum_c w1[c,k]),
    # then a single roll + mask per tap.
    acc = [None, None]
    for k in range(9):
        t = xs[0] * w1_ref[k]
        for c in range(1, C):
            t = t + xs[c] * w1_ref[c * 9 + k]
        t = t - avg * w1s_ref[k]
        s = shifted(t, k)
        j = k & 1
        acc[j] = s if acc[j] is None else acc[j] + s
    conv1 = acc[0] + acc[1]

    # ---- conv2: Conv2d(2, 1, 3, padding=1, bias=False) on [conv1, avg] ------
    acc = [None, None]
    for k in range(9):
        t = conv1 * w2_ref[k] + avg * w2_ref[9 + k]
        s = shifted(t, k)
        j = k & 1
        acc[j] = s if acc[j] is None else acc[j] + s
    conv2 = acc[0] + acc[1]

    # ---- sigmoid: exp on EUP, exact reciprocal (accuracy budget 2e-5) -------
    o_ref[...] = pl.reciprocal(1.0 + jnp.exp(-conv2), approx=False)


def _boundary_masks(H, W):
    """f32 (16, HW) masks; row k = tap (dh, dw), 1.0 where the tap is inside."""
    HW = H * W
    pos = jnp.arange(HW, dtype=jnp.int32)
    row = pos // W
    col = pos % W
    rows = []
    for dh in (-1, 0, 1):
        for dw in (-1, 0, 1):
            ok = jnp.ones((HW,), dtype=bool)
            if dh == 1:
                ok = ok & (row < H - 1)
            elif dh == -1:
                ok = ok & (row >= 1)
            if dw == 1:
                ok = ok & (col < W - 1)
            elif dw == -1:
                ok = ok & (col >= 1)
            rows.append(ok.astype(jnp.float32))
    m = jnp.stack(rows, axis=0)                                   # (9, HW)
    pad = jnp.zeros((_MASK_ROWS - 9, HW), jnp.float32)
    return jnp.concatenate([m, pad], axis=0)                      # (16, HW)


def edge_attention(x, w1, w2, *, tn=None):
    """x: (N, C, H, W) f32; w1: (1, C, 3, 3); w2: (1, 2, 3, 3) -> (N, 1, H, W)."""
    N, C, H, W = x.shape
    HW = H * W
    CHW = C * HW

    # Pad batch to a multiple of 8 with at least 2 grid steps (keeps both v7x
    # TensorCores busy); padded rows are cropped from the output.
    Np = ((N + 7) // 8) * 8
    if Np < 16:
        Np = 16
    if tn is None:
        tn = 8
        for cand in (16, 8):                 # TN capped at 16: register pressure
            if Np % cand == 0 and Np // cand >= 2:
                tn = cand
                break
    assert Np % tn == 0

    # TODO(synk): for shapes where H*W is not a multiple of 128, pad HW in the
    # wrapper (and extend the masks) to keep output stores lane-dense.

    x2 = x.reshape(N, CHW).astype(jnp.float32)
    if Np != N:
        x2 = jnp.concatenate([x2, jnp.zeros((Np - N, CHW), jnp.float32)], axis=0)

    w1m = w1.reshape(C, 9).astype(jnp.float32)
    w1sum = w1m.sum(axis=0)                  # per-tap channel sum (folds avg term)
    w1f = w1m.reshape(C * 9)
    w2f = w2.reshape(2 * 9).astype(jnp.float32)

    masks = _boundary_masks(H, W)

    kernel = functools.partial(_edge_attention_kernel, C=C, H=H, W=W)

    out2 = pl.pallas_call(
        kernel,
        out_shape=jax.ShapeDtypeStruct((Np, HW), jnp.float32),
        grid_spec=pltpu.PrefetchScalarGridSpec(
            num_scalar_prefetch=3,
            grid=(Np // tn,),
            in_specs=[
                pl.BlockSpec((_MASK_ROWS, HW), lambda n, *refs: (0, 0)),
                pl.BlockSpec((tn, CHW), lambda n, *refs: (n, 0)),
            ],
            out_specs=pl.BlockSpec((tn, HW), lambda n, *refs: (n, 0)),
        ),
        compiler_params=pltpu.CompilerParams(
            dimension_semantics=("parallel",),
        ),
    )(w1f, w1sum, w2f, masks, x2)

    return out2[:N].reshape(N, 1, H, W)


def ref_forward(x, w1, w2):
    """Pure-JAX reference matching the PyTorch module."""
    avg = jnp.mean(x, axis=1, keepdims=True)
    xe = x - avg
    dn = ("NCHW", "OIHW", "NCHW")
    c1 = jax.lax.conv_general_dilated(xe, w1, (1, 1), "SAME", dimension_numbers=dn)
    cat = jnp.concatenate([c1, avg], axis=1)
    c2 = jax.lax.conv_general_dilated(cat, w2, (1, 1), "SAME", dimension_numbers=dn)
    return jax.nn.sigmoid(c2)


if __name__ == "__main__":
    # Small shapes consistent with the module: planes=4, kernel_size=3.
    N, C, H, W = 2, 4, 16, 16
    key = jax.random.PRNGKey(0)
    kx, kw1, kw2 = jax.random.split(key, 3)

    x = jax.random.normal(kx, (N, C, H, W), dtype=jnp.float32)

    # Deterministic init mimicking PyTorch's default bound 1/sqrt(fan_in).
    b1 = 1.0 / jnp.sqrt(jnp.float32(C * 3 * 3))
    b2 = 1.0 / jnp.sqrt(jnp.float32(2 * 3 * 3))
    w1 = jax.random.uniform(kw1, (1, C, 3, 3), jnp.float32, minval=-b1, maxval=b1)
    w2 = jax.random.uniform(kw2, (1, 2, 3, 3), jnp.float32, minval=-b2, maxval=b2)

    out = edge_attention(x, w1, w2)
    out = jax.block_until_ready(out)

    ref = jax.block_until_ready(ref_forward(x, w1, w2))
    assert out.shape == (N, 1, H, W)
    assert jnp.allclose(out, ref, atol=2e-5, rtol=1e-5), "mismatch vs reference"

    print("KERNEL_OK")
</pallas_src>

<mosaic_0001>
module attributes {stable_mosaic.version = 11 : i64} {
  func.func @_edge_attention_kernel(%arg0: i32, %arg1: memref<36xf32, #tpu.memory_space<smem>>, %arg2: memref<9xf32, #tpu.memory_space<smem>>, %arg3: memref<18xf32, #tpu.memory_space<smem>>, %arg4: memref<16x256xf32, #tpu.memory_space<vmem>>, %arg5: memref<8x1024xf32, #tpu.memory_space<vmem>>, %arg6: memref<8x256xf32, #tpu.memory_space<vmem>>) attributes {dimension_semantics = [#tpu.dimension_semantics<parallel>], iteration_bounds = array<i64: 2>, scalar_prefetch = 3 : i64, scratch_operands = 0 : i64, tpu.core_type = #tpu.core_type<tc>, window_params = [{pipeline_mode = #tpu.pipeline_mode<synchronous>, transform_indices = @transform_0, window_bounds = array<i64: 16, 256>}, {transform_indices = @transform_1, window_bounds = array<i64: 8, 1024>}, {transform_indices = @transform_2, window_bounds = array<i64: 8, 256>}]} {
    %c0 = arith.constant 0 : index
    %c0_0 = arith.constant 0 : index
    %0 = vector.load %arg5[%c0, %c0_0] : memref<8x1024xf32, #tpu.memory_space<vmem>>, vector<8x256xf32>
    %c0_1 = arith.constant 0 : index
    %c256 = arith.constant 256 : index
    %1 = vector.load %arg5[%c0_1, %c256] : memref<8x1024xf32, #tpu.memory_space<vmem>>, vector<8x256xf32>
    %c0_2 = arith.constant 0 : index
    %c512 = arith.constant 512 : index
    %2 = vector.load %arg5[%c0_2, %c512] : memref<8x1024xf32, #tpu.memory_space<vmem>>, vector<8x256xf32>
    %c0_3 = arith.constant 0 : index
    %c768 = arith.constant 768 : index
    %3 = vector.load %arg5[%c0_3, %c768] : memref<8x1024xf32, #tpu.memory_space<vmem>>, vector<8x256xf32>
    %4 = arith.addf %0, %1 : vector<8x256xf32>
    %5 = arith.addf %4, %2 : vector<8x256xf32>
    %6 = arith.addf %5, %3 : vector<8x256xf32>
    %cst = arith.constant 2.500000e-01 : f32
    %7 = vector.broadcast %cst : f32 to vector<8x256xf32>
    %8 = arith.mulf %6, %7 : vector<8x256xf32>
    %c0_4 = arith.constant 0 : index
    %c0_5 = arith.constant 0 : index
    %9 = vector.load %arg4[%c0_4, %c0_5] : memref<16x256xf32, #tpu.memory_space<vmem>>, vector<1x256xf32>
    %c1 = arith.constant 1 : index
    %c0_6 = arith.constant 0 : index
    %10 = vector.load %arg4[%c1, %c0_6] : memref<16x256xf32, #tpu.memory_space<vmem>>, vector<1x256xf32>
    %c2 = arith.constant 2 : index
    %c0_7 = arith.constant 0 : index
    %11 = vector.load %arg4[%c2, %c0_7] : memref<16x256xf32, #tpu.memory_space<vmem>>, vector<1x256xf32>
    %c3 = arith.constant 3 : index
    %c0_8 = arith.constant 0 : index
    %12 = vector.load %arg4[%c3, %c0_8] : memref<16x256xf32, #tpu.memory_space<vmem>>, vector<1x256xf32>
    %c5 = arith.constant 5 : index
    %c0_9 = arith.constant 0 : index
    %13 = vector.load %arg4[%c5, %c0_9] : memref<16x256xf32, #tpu.memory_space<vmem>>, vector<1x256xf32>
    %c6 = arith.constant 6 : index
    %c0_10 = arith.constant 0 : index
    %14 = vector.load %arg4[%c6, %c0_10] : memref<16x256xf32, #tpu.memory_space<vmem>>, vector<1x256xf32>
    %c7 = arith.constant 7 : index
    %c0_11 = arith.constant 0 : index
    %15 = vector.load %arg4[%c7, %c0_11] : memref<16x256xf32, #tpu.memory_space<vmem>>, vector<1x256xf32>
    %c8 = arith.constant 8 : index
    %c0_12 = arith.constant 0 : index
    %16 = vector.load %arg4[%c8, %c0_12] : memref<16x256xf32, #tpu.memory_space<vmem>>, vector<1x256xf32>
    %c0_13 = arith.constant 0 : index
    %17 = memref.load %arg1[%c0_13] : memref<36xf32, #tpu.memory_space<smem>>
    %18 = vector.broadcast %17 : f32 to vector<8x256xf32>
    %19 = arith.mulf %0, %18 : vector<8x256xf32>
    %c9 = arith.constant 9 : index
    %20 = memref.load %arg1[%c9] : memref<36xf32, #tpu.memory_space<smem>>
    %21 = vector.broadcast %20 : f32 to vector<8x256xf32>
    %22 = arith.mulf %1, %21 : vector<8x256xf32>
    %23 = arith.addf %19, %22 : vector<8x256xf32>
    %c18 = arith.constant 18 : index
    %24 = memref.load %arg1[%c18] : memref<36xf32, #tpu.memory_space<smem>>
    %25 = vector.broadcast %24 : f32 to vector<8x256xf32>
    %26 = arith.mulf %2, %25 : vector<8x256xf32>
    %27 = arith.addf %23, %26 : vector<8x256xf32>
    %c27 = arith.constant 27 : index
    %28 = memref.load %arg1[%c27] : memref<36xf32, #tpu.memory_space<smem>>
    %29 = vector.broadcast %28 : f32 to vector<8x256xf32>
    %30 = arith.mulf %3, %29 : vector<8x256xf32>
    %31 = arith.addf %27, %30 : vector<8x256xf32>
    %c0_14 = arith.constant 0 : index
    %32 = memref.load %arg2[%c0_14] : memref<9xf32, #tpu.memory_space<smem>>
    %33 = vector.broadcast %32 : f32 to vector<8x256xf32>
    %34 = arith.mulf %8, %33 : vector<8x256xf32>
    %35 = arith.subf %31, %34 : vector<8x256xf32>
    %c17_i32 = arith.constant 17 : i32
    %36 = tpu.dynamic_rotate %35 by %c17_i32 dim 1 : vector<8x256xf32>, i32 -> vector<8x256xf32>
    %37 = vector.broadcast %9 : vector<1x256xf32> to vector<8x256xf32>
    %38 = arith.mulf %36, %37 : vector<8x256xf32>
    %c1_15 = arith.constant 1 : index
    %39 = memref.load %arg1[%c1_15] : memref<36xf32, #tpu.memory_space<smem>>
    %40 = vector.broadcast %39 : f32 to vector<8x256xf32>
    %41 = arith.mulf %0, %40 : vector<8x256xf32>
    %c10 = arith.constant 10 : index
    %42 = memref.load %arg1[%c10] : memref<36xf32, #tpu.memory_space<smem>>
    %43 = vector.broadcast %42 : f32 to vector<8x256xf32>
    %44 = arith.mulf %1, %43 : vector<8x256xf32>
    %45 = arith.addf %41, %44 : vector<8x256xf32>
    %c19 = arith.constant 19 : index
    %46 = memref.load %arg1[%c19] : memref<36xf32, #tpu.memory_space<smem>>
    %47 = vector.broadcast %46 : f32 to vector<8x256xf32>
    %48 = arith.mulf %2, %47 : vector<8x256xf32>
    %49 = arith.addf %45, %48 : vector<8x256xf32>
    %c28 = arith.constant 28 : index
    %50 = memref.load %arg1[%c28] : memref<36xf32, #tpu.memory_space<smem>>
    %51 = vector.broadcast %50 : f32 to vector<8x256xf32>
    %52 = arith.mulf %3, %51 : vector<8x256xf32>
    %53 = arith.addf %49, %52 : vector<8x256xf32>
    %c1_16 = arith.constant 1 : index
    %54 = memref.load %arg2[%c1_16] : memref<9xf32, #tpu.memory_space<smem>>
    %55 = vector.broadcast %54 : f32 to vector<8x256xf32>
    %56 = arith.mulf %8, %55 : vector<8x256xf32>
    %57 = arith.subf %53, %56 : vector<8x256xf32>
    %c16_i32 = arith.constant 16 : i32
    %58 = tpu.dynamic_rotate %57 by %c16_i32 dim 1 : vector<8x256xf32>, i32 -> vector<8x256xf32>
    %59 = vector.broadcast %10 : vector<1x256xf32> to vector<8x256xf32>
    %60 = arith.mulf %58, %59 : vector<8x256xf32>
    %c2_17 = arith.constant 2 : index
    %61 = memref.load %arg1[%c2_17] : memref<36xf32, #tpu.memory_space<smem>>
    %62 = vector.broadcast %61 : f32 to vector<8x256xf32>
    %63 = arith.mulf %0, %62 : vector<8x256xf32>
    %c11 = arith.constant 11 : index
    %64 = memref.load %arg1[%c11] : memref<36xf32, #tpu.memory_space<smem>>
    %65 = vector.broadcast %64 : f32 to vector<8x256xf32>
    %66 = arith.mulf %1, %65 : vector<8x256xf32>
    %67 = arith.addf %63, %66 : vector<8x256xf32>
    %c20 = arith.constant 20 : index
    %68 = memref.load %arg1[%c20] : memref<36xf32, #tpu.memory_space<smem>>
    %69 = vector.broadcast %68 : f32 to vector<8x256xf32>
    %70 = arith.mulf %2, %69 : vector<8x256xf32>
    %71 = arith.addf %67, %70 : vector<8x256xf32>
    %c29 = arith.constant 29 : index
    %72 = memref.load %arg1[%c29] : memref<36xf32, #tpu.memory_space<smem>>
    %73 = vector.broadcast %72 : f32 to vector<8x256xf32>
    %74 = arith.mulf %3, %73 : vector<8x256xf32>
    %75 = arith.addf %71, %74 : vector<8x256xf32>
    %c2_18 = arith.constant 2 : index
    %76 = memref.load %arg2[%c2_18] : memref<9xf32, #tpu.memory_space<smem>>
    %77 = vector.broadcast %76 : f32 to vector<8x256xf32>
    %78 = arith.mulf %8, %77 : vector<8x256xf32>
    %79 = arith.subf %75, %78 : vector<8x256xf32>
    %c15_i32 = arith.constant 15 : i32
    %80 = tpu.dynamic_rotate %79 by %c15_i32 dim 1 : vector<8x256xf32>, i32 -> vector<8x256xf32>
    %81 = vector.broadcast %11 : vector<1x256xf32> to vector<8x256xf32>
    %82 = arith.mulf %80, %81 : vector<8x256xf32>
    %83 = arith.addf %38, %82 : vector<8x256xf32>
    %c3_19 = arith.constant 3 : index
    %84 = memref.load %arg1[%c3_19] : memref<36xf32, #tpu.memory_space<smem>>
    %85 = vector.broadcast %84 : f32 to vector<8x256xf32>
    %86 = arith.mulf %0, %85 : vector<8x256xf32>
    %c12 = arith.constant 12 : index
    %87 = memref.load %arg1[%c12] : memref<36xf32, #tpu.memory_space<smem>>
    %88 = vector.broadcast %87 : f32 to vector<8x256xf32>
    %89 = arith.mulf %1, %88 : vector<8x256xf32>
    %90 = arith.addf %86, %89 : vector<8x256xf32>
    %c21 = arith.constant 21 : index
    %91 = memref.load %arg1[%c21] : memref<36xf32, #tpu.memory_space<smem>>
    %92 = vector.broadcast %91 : f32 to vector<8x256xf32>
    %93 = arith.mulf %2, %92 : vector<8x256xf32>
    %94 = arith.addf %90, %93 : vector<8x256xf32>
    %c30 = arith.constant 30 : index
    %95 = memref.load %arg1[%c30] : memref<36xf32, #tpu.memory_space<smem>>
    %96 = vector.broadcast %95 : f32 to vector<8x256xf32>
    %97 = arith.mulf %3, %96 : vector<8x256xf32>
    %98 = arith.addf %94, %97 : vector<8x256xf32>
    %c3_20 = arith.constant 3 : index
    %99 = memref.load %arg2[%c3_20] : memref<9xf32, #tpu.memory_space<smem>>
    %100 = vector.broadcast %99 : f32 to vector<8x256xf32>
    %101 = arith.mulf %8, %100 : vector<8x256xf32>
    %102 = arith.subf %98, %101 : vector<8x256xf32>
    %c1_i32 = arith.constant 1 : i32
    %103 = tpu.dynamic_rotate %102 by %c1_i32 dim 1 : vector<8x256xf32>, i32 -> vector<8x256xf32>
    %104 = vector.broadcast %12 : vector<1x256xf32> to vector<8x256xf32>
    %105 = arith.mulf %103, %104 : vector<8x256xf32>
    %106 = arith.addf %60, %105 : vector<8x256xf32>
    %c4 = arith.constant 4 : index
    %107 = memref.load %arg1[%c4] : memref<36xf32, #tpu.memory_space<smem>>
    %108 = vector.broadcast %107 : f32 to vector<8x256xf32>
    %109 = arith.mulf %0, %108 : vector<8x256xf32>
    %c13 = arith.constant 13 : index
    %110 = memref.load %arg1[%c13] : memref<36xf32, #tpu.memory_space<smem>>
    %111 = vector.broadcast %110 : f32 to vector<8x256xf32>
    %112 = arith.mulf %1, %111 : vector<8x256xf32>
    %113 = arith.addf %109, %112 : vector<8x256xf32>
    %c22 = arith.constant 22 : index
    %114 = memref.load %arg1[%c22] : memref<36xf32, #tpu.memory_space<smem>>
    %115 = vector.broadcast %114 : f32 to vector<8x256xf32>
    %116 = arith.mulf %2, %115 : vector<8x256xf32>
    %117 = arith.addf %113, %116 : vector<8x256xf32>
    %c31 = arith.constant 31 : index
    %118 = memref.load %arg1[%c31] : memref<36xf32, #tpu.memory_space<smem>>
    %119 = vector.broadcast %118 : f32 to vector<8x256xf32>
    %120 = arith.mulf %3, %119 : vector<8x256xf32>
    %121 = arith.addf %117, %120 : vector<8x256xf32>
    %c4_21 = arith.constant 4 : index
    %122 = memref.load %arg2[%c4_21] : memref<9xf32, #tpu.memory_space<smem>>
    %123 = vector.broadcast %122 : f32 to vector<8x256xf32>
    %124 = arith.mulf %8, %123 : vector<8x256xf32>
    %125 = arith.subf %121, %124 : vector<8x256xf32>
    %126 = arith.addf %83, %125 : vector<8x256xf32>
    %c5_22 = arith.constant 5 : index
    %127 = memref.load %arg1[%c5_22] : memref<36xf32, #tpu.memory_space<smem>>
    %128 = vector.broadcast %127 : f32 to vector<8x256xf32>
    %129 = arith.mulf %0, %128 : vector<8x256xf32>
    %c14 = arith.constant 14 : index
    %130 = memref.load %arg1[%c14] : memref<36xf32, #tpu.memory_space<smem>>
    %131 = vector.broadcast %130 : f32 to vector<8x256xf32>
    %132 = arith.mulf %1, %131 : vector<8x256xf32>
    %133 = arith.addf %129, %132 : vector<8x256xf32>
    %c23 = arith.constant 23 : index
    %134 = memref.load %arg1[%c23] : memref<36xf32, #tpu.memory_space<smem>>
    %135 = vector.broadcast %134 : f32 to vector<8x256xf32>
    %136 = arith.mulf %2, %135 : vector<8x256xf32>
    %137 = arith.addf %133, %136 : vector<8x256xf32>
    %c32 = arith.constant 32 : index
    %138 = memref.load %arg1[%c32] : memref<36xf32, #tpu.memory_space<smem>>
    %139 = vector.broadcast %138 : f32 to vector<8x256xf32>
    %140 = arith.mulf %3, %139 : vector<8x256xf32>
    %141 = arith.addf %137, %140 : vector<8x256xf32>
    %c5_23 = arith.constant 5 : index
    %142 = memref.load %arg2[%c5_23] : memref<9xf32, #tpu.memory_space<smem>>
    %143 = vector.broadcast %142 : f32 to vector<8x256xf32>
    %144 = arith.mulf %8, %143 : vector<8x256xf32>
    %145 = arith.subf %141, %144 : vector<8x256xf32>
    %c255_i32 = arith.constant 255 : i32
    %146 = tpu.dynamic_rotate %145 by %c255_i32 dim 1 : vector<8x256xf32>, i32 -> vector<8x256xf32>
    %147 = vector.broadcast %13 : vector<1x256xf32> to vector<8x256xf32>
    %148 = arith.mulf %146, %147 : vector<8x256xf32>
    %149 = arith.addf %106, %148 : vector<8x256xf32>
    %c6_24 = arith.constant 6 : index
    %150 = memref.load %arg1[%c6_24] : memref<36xf32, #tpu.memory_space<smem>>
    %151 = vector.broadcast %150 : f32 to vector<8x256xf32>
    %152 = arith.mulf %0, %151 : vector<8x256xf32>
    %c15 = arith.constant 15 : index
    %153 = memref.load %arg1[%c15] : memref<36xf32, #tpu.memory_space<smem>>
    %154 = vector.broadcast %153 : f32 to vector<8x256xf32>
    %155 = arith.mulf %1, %154 : vector<8x256xf32>
    %156 = arith.addf %152, %155 : vector<8x256xf32>
    %c24 = arith.constant 24 : index
    %157 = memref.load %arg1[%c24] : memref<36xf32, #tpu.memory_space<smem>>
    %158 = vector.broadcast %157 : f32 to vector<8x256xf32>
    %159 = arith.mulf %2, %158 : vector<8x256xf32>
    %160 = arith.addf %156, %159 : vector<8x256xf32>
    %c33 = arith.constant 33 : index
    %161 = memref.load %arg1[%c33] : memref<36xf32, #tpu.memory_space<smem>>
    %162 = vector.broadcast %161 : f32 to vector<8x256xf32>
    %163 = arith.mulf %3, %162 : vector<8x256xf32>
    %164 = arith.addf %160, %163 : vector<8x256xf32>
    %c6_25 = arith.constant 6 : index
    %165 = memref.load %arg2[%c6_25] : memref<9xf32, #tpu.memory_space<smem>>
    %166 = vector.broadcast %165 : f32 to vector<8x256xf32>
    %167 = arith.mulf %8, %166 : vector<8x256xf32>
    %168 = arith.subf %164, %167 : vector<8x256xf32>
    %c241_i32 = arith.constant 241 : i32
    %169 = tpu.dynamic_rotate %168 by %c241_i32 dim 1 : vector<8x256xf32>, i32 -> vector<8x256xf32>
    %170 = vector.broadcast %14 : vector<1x256xf32> to vector<8x256xf32>
    %171 = arith.mulf %169, %170 : vector<8x256xf32>
    %172 = arith.addf %126, %171 : vector<8x256xf32>
    %c7_26 = arith.constant 7 : index
    %173 = memref.load %arg1[%c7_26] : memref<36xf32, #tpu.memory_space<smem>>
    %174 = vector.broadcast %173 : f32 to vector<8x256xf32>
    %175 = arith.mulf %0, %174 : vector<8x256xf32>
    %c16 = arith.constant 16 : index
    %176 = memref.load %arg1[%c16] : memref<36xf32, #tpu.memory_space<smem>>
    %177 = vector.broadcast %176 : f32 to vector<8x256xf32>
    %178 = arith.mulf %1, %177 : vector<8x256xf32>
    %179 = arith.addf %175, %178 : vector<8x256xf32>
    %c25 = arith.constant 25 : index
    %180 = memref.load %arg1[%c25] : memref<36xf32, #tpu.memory_space<smem>>
    %181 = vector.broadcast %180 : f32 to vector<8x256xf32>
    %182 = arith.mulf %2, %181 : vector<8x256xf32>
    %183 = arith.addf %179, %182 : vector<8x256xf32>
    %c34 = arith.constant 34 : index
    %184 = memref.load %arg1[%c34] : memref<36xf32, #tpu.memory_space<smem>>
    %185 = vector.broadcast %184 : f32 to vector<8x256xf32>
    %186 = arith.mulf %3, %185 : vector<8x256xf32>
    %187 = arith.addf %183, %186 : vector<8x256xf32>
    %c7_27 = arith.constant 7 : index
    %188 = memref.load %arg2[%c7_27] : memref<9xf32, #tpu.memory_space<smem>>
    %189 = vector.broadcast %188 : f32 to vector<8x256xf32>
    %190 = arith.mulf %8, %189 : vector<8x256xf32>
    %191 = arith.subf %187, %190 : vector<8x256xf32>
    %c240_i32 = arith.constant 240 : i32
    %192 = tpu.dynamic_rotate %191 by %c240_i32 dim 1 : vector<8x256xf32>, i32 -> vector<8x256xf32>
    %193 = vector.broadcast %15 : vector<1x256xf32> to vector<8x256xf32>
    %194 = arith.mulf %192, %193 : vector<8x256xf32>
    %195 = arith.addf %149, %194 : vector<8x256xf32>
    %c8_28 = arith.constant 8 : index
    %196 = memref.load %arg1[%c8_28] : memref<36xf32, #tpu.memory_space<smem>>
    %197 = vector.broadcast %196 : f32 to vector<8x256xf32>
    %198 = arith.mulf %0, %197 : vector<8x256xf32>
    %c17 = arith.constant 17 : index
    %199 = memref.load %arg1[%c17] : memref<36xf32, #tpu.memory_space<smem>>
    %200 = vector.broadcast %199 : f32 to vector<8x256xf32>
    %201 = arith.mulf %1, %200 : vector<8x256xf32>
    %202 = arith.addf %198, %201 : vector<8x256xf32>
    %c26 = arith.constant 26 : index
    %203 = memref.load %arg1[%c26] : memref<36xf32, #tpu.memory_space<smem>>
    %204 = vector.broadcast %203 : f32 to vector<8x256xf32>
    %205 = arith.mulf %2, %204 : vector<8x256xf32>
    %206 = arith.addf %202, %205 : vector<8x256xf32>
    %c35 = arith.constant 35 : index
    %207 = memref.load %arg1[%c35] : memref<36xf32, #tpu.memory_space<smem>>
    %208 = vector.broadcast %207 : f32 to vector<8x256xf32>
    %209 = arith.mulf %3, %208 : vector<8x256xf32>
    %210 = arith.addf %206, %209 : vector<8x256xf32>
    %c8_29 = arith.constant 8 : index
    %211 = memref.load %arg2[%c8_29] : memref<9xf32, #tpu.memory_space<smem>>
    %212 = vector.broadcast %211 : f32 to vector<8x256xf32>
    %213 = arith.mulf %8, %212 : vector<8x256xf32>
    %214 = arith.subf %210, %213 : vector<8x256xf32>
    %c239_i32 = arith.constant 239 : i32
    %215 = tpu.dynamic_rotate %214 by %c239_i32 dim 1 : vector<8x256xf32>, i32 -> vector<8x256xf32>
    %216 = vector.broadcast %16 : vector<1x256xf32> to vector<8x256xf32>
    %217 = arith.mulf %215, %216 : vector<8x256xf32>
    %218 = arith.addf %172, %217 : vector<8x256xf32>
    %219 = arith.addf %218, %195 : vector<8x256xf32>
    %c0_30 = arith.constant 0 : index
    %220 = memref.load %arg3[%c0_30] : memref<18xf32, #tpu.memory_space<smem>>
    %221 = vector.broadcast %220 : f32 to vector<8x256xf32>
    %222 = arith.mulf %219, %221 : vector<8x256xf32>
    %c9_31 = arith.constant 9 : index
    %223 = memref.load %arg3[%c9_31] : memref<18xf32, #tpu.memory_space<smem>>
    %224 = vector.broadcast %223 : f32 to vector<8x256xf32>
    %225 = arith.mulf %8, %224 : vector<8x256xf32>
    %226 = arith.addf %222, %225 : vector<8x256xf32>
    %c17_i32_32 = arith.constant 17 : i32
    %227 = tpu.dynamic_rotate %226 by %c17_i32_32 dim 1 : vector<8x256xf32>, i32 -> vector<8x256xf32>
    %228 = vector.broadcast %9 : vector<1x256xf32> to vector<8x256xf32>
    %229 = arith.mulf %227, %228 : vector<8x256xf32>
    %c1_33 = arith.constant 1 : index
    %230 = memref.load %arg3[%c1_33] : memref<18xf32, #tpu.memory_space<smem>>
    %231 = vector.broadcast %230 : f32 to vector<8x256xf32>
    %232 = arith.mulf %219, %231 : vector<8x256xf32>
    %c10_34 = arith.constant 10 : index
    %233 = memref.load %arg3[%c10_34] : memref<18xf32, #tpu.memory_space<smem>>
    %234 = vector.broadcast %233 : f32 to vector<8x256xf32>
    %235 = arith.mulf %8, %234 : vector<8x256xf32>
    %236 = arith.addf %232, %235 : vector<8x256xf32>
    %c16_i32_35 = arith.constant 16 : i32
    %237 = tpu.dynamic_rotate %236 by %c16_i32_35 dim 1 : vector<8x256xf32>, i32 -> vector<8x256xf32>
    %238 = vector.broadcast %10 : vector<1x256xf32> to vector<8x256xf32>
    %239 = arith.mulf %237, %238 : vector<8x256xf32>
    %c2_36 = arith.constant 2 : index
    %240 = memref.load %arg3[%c2_36] : memref<18xf32, #tpu.memory_space<smem>>
    %241 = vector.broadcast %240 : f32 to vector<8x256xf32>
    %242 = arith.mulf %219, %241 : vector<8x256xf32>
    %c11_37 = arith.constant 11 : index
    %243 = memref.load %arg3[%c11_37] : memref<18xf32, #tpu.memory_space<smem>>
    %244 = vector.broadcast %243 : f32 to vector<8x256xf32>
    %245 = arith.mulf %8, %244 : vector<8x256xf32>
    %246 = arith.addf %242, %245 : vector<8x256xf32>
    %c15_i32_38 = arith.constant 15 : i32
    %247 = tpu.dynamic_rotate %246 by %c15_i32_38 dim 1 : vector<8x256xf32>, i32 -> vector<8x256xf32>
    %248 = vector.broadcast %11 : vector<1x256xf32> to vector<8x256xf32>
    %249 = arith.mulf %247, %248 : vector<8x256xf32>
    %250 = arith.addf %229, %249 : vector<8x256xf32>
    %c3_39 = arith.constant 3 : index
    %251 = memref.load %arg3[%c3_39] : memref<18xf32, #tpu.memory_space<smem>>
    %252 = vector.broadcast %251 : f32 to vector<8x256xf32>
    %253 = arith.mulf %219, %252 : vector<8x256xf32>
    %c12_40 = arith.constant 12 : index
    %254 = memref.load %arg3[%c12_40] : memref<18xf32, #tpu.memory_space<smem>>
    %255 = vector.broadcast %254 : f32 to vector<8x256xf32>
    %256 = arith.mulf %8, %255 : vector<8x256xf32>
    %257 = arith.addf %253, %256 : vector<8x256xf32>
    %c1_i32_41 = arith.constant 1 : i32
    %258 = tpu.dynamic_rotate %257 by %c1_i32_41 dim 1 : vector<8x256xf32>, i32 -> vector<8x256xf32>
    %259 = vector.broadcast %12 : vector<1x256xf32> to vector<8x256xf32>
    %260 = arith.mulf %258, %259 : vector<8x256xf32>
    %261 = arith.addf %239, %260 : vector<8x256xf32>
    %c4_42 = arith.constant 4 : index
    %262 = memref.load %arg3[%c4_42] : memref<18xf32, #tpu.memory_space<smem>>
    %263 = vector.broadcast %262 : f32 to vector<8x256xf32>
    %264 = arith.mulf %219, %263 : vector<8x256xf32>
    %c13_43 = arith.constant 13 : index
    %265 = memref.load %arg3[%c13_43] : memref<18xf32, #tpu.memory_space<smem>>
    %266 = vector.broadcast %265 : f32 to vector<8x256xf32>
    %267 = arith.mulf %8, %266 : vector<8x256xf32>
    %268 = arith.addf %264, %267 : vector<8x256xf32>
    %269 = arith.addf %250, %268 : vector<8x256xf32>
    %c5_44 = arith.constant 5 : index
    %270 = memref.load %arg3[%c5_44] : memref<18xf32, #tpu.memory_space<smem>>
    %271 = vector.broadcast %270 : f32 to vector<8x256xf32>
    %272 = arith.mulf %219, %271 : vector<8x256xf32>
    %c14_45 = arith.constant 14 : index
    %273 = memref.load %arg3[%c14_45] : memref<18xf32, #tpu.memory_space<smem>>
    %274 = vector.broadcast %273 : f32 to vector<8x256xf32>
    %275 = arith.mulf %8, %274 : vector<8x256xf32>
    %276 = arith.addf %272, %275 : vector<8x256xf32>
    %c255_i32_46 = arith.constant 255 : i32
    %277 = tpu.dynamic_rotate %276 by %c255_i32_46 dim 1 : vector<8x256xf32>, i32 -> vector<8x256xf32>
    %278 = vector.broadcast %13 : vector<1x256xf32> to vector<8x256xf32>
    %279 = arith.mulf %277, %278 : vector<8x256xf32>
    %280 = arith.addf %261, %279 : vector<8x256xf32>
    %c6_47 = arith.constant 6 : index
    %281 = memref.load %arg3[%c6_47] : memref<18xf32, #tpu.memory_space<smem>>
    %282 = vector.broadcast %281 : f32 to vector<8x256xf32>
    %283 = arith.mulf %219, %282 : vector<8x256xf32>
    %c15_48 = arith.constant 15 : index
    %284 = memref.load %arg3[%c15_48] : memref<18xf32, #tpu.memory_space<smem>>
    %285 = vector.broadcast %284 : f32 to vector<8x256xf32>
    %286 = arith.mulf %8, %285 : vector<8x256xf32>
    %287 = arith.addf %283, %286 : vector<8x256xf32>
    %c241_i32_49 = arith.constant 241 : i32
    %288 = tpu.dynamic_rotate %287 by %c241_i32_49 dim 1 : vector<8x256xf32>, i32 -> vector<8x256xf32>
    %289 = vector.broadcast %14 : vector<1x256xf32> to vector<8x256xf32>
    %290 = arith.mulf %288, %289 : vector<8x256xf32>
    %291 = arith.addf %269, %290 : vector<8x256xf32>
    %c7_50 = arith.constant 7 : index
    %292 = memref.load %arg3[%c7_50] : memref<18xf32, #tpu.memory_space<smem>>
    %293 = vector.broadcast %292 : f32 to vector<8x256xf32>
    %294 = arith.mulf %219, %293 : vector<8x256xf32>
    %c16_51 = arith.constant 16 : index
    %295 = memref.load %arg3[%c16_51] : memref<18xf32, #tpu.memory_space<smem>>
    %296 = vector.broadcast %295 : f32 to vector<8x256xf32>
    %297 = arith.mulf %8, %296 : vector<8x256xf32>
    %298 = arith.addf %294, %297 : vector<8x256xf32>
    %c240_i32_52 = arith.constant 240 : i32
    %299 = tpu.dynamic_rotate %298 by %c240_i32_52 dim 1 : vector<8x256xf32>, i32 -> vector<8x256xf32>
    %300 = vector.broadcast %15 : vector<1x256xf32> to vector<8x256xf32>
    %301 = arith.mulf %299, %300 : vector<8x256xf32>
    %302 = arith.addf %280, %301 : vector<8x256xf32>
    %c8_53 = arith.constant 8 : index
    %303 = memref.load %arg3[%c8_53] : memref<18xf32, #tpu.memory_space<smem>>
    %304 = vector.broadcast %303 : f32 to vector<8x256xf32>
    %305 = arith.mulf %219, %304 : vector<8x256xf32>
    %c17_54 = arith.constant 17 : index
    %306 = memref.load %arg3[%c17_54] : memref<18xf32, #tpu.memory_space<smem>>
    %307 = vector.broadcast %306 : f32 to vector<8x256xf32>
    %308 = arith.mulf %8, %307 : vector<8x256xf32>
    %309 = arith.addf %305, %308 : vector<8x256xf32>
    %c239_i32_55 = arith.constant 239 : i32
    %310 = tpu.dynamic_rotate %309 by %c239_i32_55 dim 1 : vector<8x256xf32>, i32 -> vector<8x256xf32>
    %311 = vector.broadcast %16 : vector<1x256xf32> to vector<8x256xf32>
    %312 = arith.mulf %310, %311 : vector<8x256xf32>
    %313 = arith.addf %291, %312 : vector<8x256xf32>
    %314 = arith.addf %313, %302 : vector<8x256xf32>
    %cst_56 = arith.constant 0.000000e+00 : f32
    %315 = vector.broadcast %cst_56 : f32 to vector<8x256xf32>
    %316 = arith.subf %315, %314 : vector<8x256xf32>
    %317 = math.exp %316 : vector<8x256xf32>
    %cst_57 = arith.constant 1.000000e+00 : f32
    %318 = vector.broadcast %cst_57 : f32 to vector<8x256xf32>
    %319 = arith.addf %318, %317 : vector<8x256xf32>
    %320 = tpu.reciprocal %319 : vector<8x256xf32> -> vector<8x256xf32>
    %c0_58 = arith.constant 0 : index
    %c0_59 = arith.constant 0 : index
    %321 = vector.load %arg6[%c0_58, %c0_59] : memref<8x256xf32, #tpu.memory_space<vmem>>, vector<8x256xf32>
    tpu.vector_store %arg6[%c0_58, %c0_59], %320 {strides = array<i32>} : memref<8x256xf32, #tpu.memory_space<vmem>>, vector<8x256xf32>,
    return
  }
  func.func @transform_0(%arg0: i32, %arg1: memref<36xf32, #tpu.memory_space<smem>>, %arg2: memref<9xf32, #tpu.memory_space<smem>>, %arg3: memref<18xf32, #tpu.memory_space<smem>>) -> (i32, i32) {
    %c0_i32 = arith.constant 0 : i32
    %c0_i32_0 = arith.constant 0 : i32
    %c0_i32_1 = arith.constant 0 : i32
    return %c0_i32, %c0_i32_0 : i32, i32
  }
  func.func @transform_1(%arg0: i32, %arg1: memref<36xf32, #tpu.memory_space<smem>>, %arg2: memref<9xf32, #tpu.memory_space<smem>>, %arg3: memref<18xf32, #tpu.memory_space<smem>>) -> (i32, i32) {
    %c0_i32 = arith.constant 0 : i32
    %c0_i32_0 = arith.constant 0 : i32
    return %arg0, %c0_i32 : i32, i32
  }
  func.func @transform_2(%arg0: i32, %arg1: memref<36xf32, #tpu.memory_space<smem>>, %arg2: memref<9xf32, #tpu.memory_space<smem>>, %arg3: memref<18xf32, #tpu.memory_space<smem>>) -> (i32, i32) {
    %c0_i32 = arith.constant 0 : i32
    %c0_i32_0 = arith.constant 0 : i32
    return %arg0, %c0_i32 : i32, i32
  }
}

</mosaic_0001>

<llo_original>
// kernel: tpu_custom_call.1
$region0: #{tpu_custom_call.1}
  #allocation0 [shape = 'u32[]', space=smem, size = 0x4, offset = 0x4, fixed_abs, tag = 'smem constant byte address 0x4 - core index']
  #allocation1 [shape = 'u32[144,128]{1,0:T(1,128)}', space=vmem, size = 0x12000, scoped, tag = 'internal scratch']
  #allocation2 [shape = 's32[1]{0}', space=sflag, size = 0x4, scoped, tag = 'scoped memory for tpu_custom_call.1']
  #allocation3 [shape = 'u8[512]{0}', space=smem, size = 0x200, scoped, tag = 'prefetched SMEM operand 0']
  #allocation4 [shape = 'u8[512]{0}', space=smem, size = 0x200, scoped, tag = 'prefetched SMEM operand 1']
  #allocation5 [shape = 'u8[512]{0}', space=smem, size = 0x200, scoped, tag = 'prefetched SMEM operand 2']
  %s0 = inlined_call_operand.hbm [shape: f32[36], index: 0, kind: input, shape index: {}]
  %s1 = inlined_call_operand.vmem [shape: f32[9], index: 1, kind: input, shape index: {}]
  %s2 = inlined_call_operand.vmem [shape: f32[18], index: 2, kind: input, shape index: {}]
  %s3 = inlined_call_operand.hbm [shape: f32[16,256], index: 3, kind: input, shape index: {}]
  %s4 = inlined_call_operand.hbm [shape: f32[16,1024], index: 4, kind: input, shape index: {}]
  %s5 = inlined_call_operand.hbm [shape: f32[16,256], index: 5, kind: output, shape index: {}]
  %s6 = sld [smem:[#allocation0]]
  $region49: #{tpu_custom_call.1} parent=0
    _
  %s8 = ssub.s32 1, %s6
  %s9 = scalar_select 0, %s8, %s6
  %11 = dma.hbm_to_smem %s0, 16, [#allocation3], [#allocation2]
  %s12 = sshll.u32 %s1, 4
  %s13 = int_to_ptr.vmem [resolvable:$true] %s12
  %15 = dma.vmem_to_smem %s13, 16, [#allocation4], [#allocation2]
  %s16 = sshll.u32 %s2, 4
  %s17 = int_to_ptr.vmem [resolvable:$true] %s16
  %19 = dma.vmem_to_smem %s17, 16, [#allocation5], [#allocation2]
  %20 = dma.done [#allocation2], 48
  %21 = sfence
  $region1: #{tpu_custom_call.1} parent=0
    #allocation6 [shape = 'u8[16384]{0}', space=vmem, size = 0x4000, scoped, tag = 'input window, operand 3, single buffered']
    #allocation7 [shape = 's32[2]{0}', space=sflag, size = 0x8, scoped, tag = 'scoped memory for tpu_custom_call.1']
    #allocation8 [shape = 's32[2]{0}', space=sflag, size = 0x8, scoped, tag = 'scoped memory for tpu_custom_call.1']
    #allocation9 [shape = 'u8[65536]{0}', space=vmem, size = 0x10000, scoped, tag = 'input window, operand 4']
    #allocation10 [shape = 's32[2]{0}', space=sflag, size = 0x8, scoped, tag = 'scoped memory for tpu_custom_call.1']
    #allocation11 [shape = 'u8[16384]{0}', space=vmem, size = 0x4000, scoped, tag = 'output window, operand 0']
    %22 = vsyncpa [#allocation7], 0
    %23 = vsyncpa [#allocation10], 0
    %s24 = scalar_lea.sflag [#allocation10], 1
    %25 = vsyncpa %s24, 0
    %26 = vsyncpa [#allocation8], 0
    %s27 = scalar_lea.sflag [#allocation8], 1
    %28 = vsyncpa %s27, 0
    loop: start=0, step=1, limit=4
    $region2: #{tpu_custom_call.1} parent=1 // loop_pre_header
      _
    $region3: #{tpu_custom_call.1} parent=1 // loop_header
      %s30 = sphi 0, %s34
      %p31 = scmp.ge.s32.totalorder %s30, 4
      %s38 = sphi 0, %s38
      %s40 = sphi 0, %s38
      %s41 = sphi 0, %s40
      %s55 = sphi 0, %s41
      %s61 = sphi 0, %s63
      %s64 = sphi 0, %s61
      %s65 = sphi 0, %s64
      %s81 = sphi 0, %s65
      %s87 = sphi 0, %s89
      %s90 = sphi 0, %s87
      %s91 = sphi 0, %s90
      %s107 = sphi 0, %s91
    $region4: #{tpu_custom_call.1} parent=1 // loop_header_branch
      %33 = sbr.rel (%p31) target = $region8
    $region5: #{tpu_custom_call.1} parent=1 // loop_body
      %s35 = ssub.s32 %s30, 1
      %s36 = ssub.s32 %s30, 2
      %s37 = sadd.s32 %s30, 1
      %s39 = sadd.s32 %s38, 1
      %p42 = scmp.eq.s32.totalorder %s30, 1
      %p43 = scmp.ne.s32.totalorder %s38, %s40
      %p44 = scmp.eq.s32.totalorder %s30, 0
      %p45 = por %p43, %p44
      %p46 = scmp.ne.s32.totalorder %s38, %s40
      %p47 = scmp.eq.s32.totalorder %s35, 1
      %p48 = por %p46, %p47
      %p49 = scmp.ne.s32.totalorder %s40, %s41
      %p50 = scmp.eq.s32.totalorder %s35, 0
      %p51 = por %p49, %p50
      %p52 = scmp.ne.s32.totalorder %s40, %s41
      %p53 = scmp.eq.s32.totalorder %s36, 1
      %p54 = por %p52, %p53
      %p56 = scmp.ne.s32.totalorder %s41, %s55
      %p57 = scmp.eq.s32.totalorder %s36, 0
      %p58 = por %p56, %p57
      %s59 = ssub.s32 %s30, %s37
      %p60 = scmp.eq.s32.totalorder %s59, 0
      %s62 = sadd.s32 %s61, 1
      %s63 = scalar_select %p60, %s61, %s62
      %p66 = pneg %p60
      %p67 = scmp.eq.s32.totalorder %s30, 1
      %p68 = por %p66, %p67
      %p69 = scmp.ne.s32.totalorder %s61, %s64
      %p70 = scmp.eq.s32.totalorder %s30, 0
      %p71 = por %p69, %p70
      %p72 = scmp.ne.s32.totalorder %s61, %s64
      %p73 = scmp.eq.s32.totalorder %s35, 1
      %p74 = por %p72, %p73
      %p75 = scmp.ne.s32.totalorder %s64, %s65
      %p76 = scmp.eq.s32.totalorder %s35, 0
      %p77 = por %p75, %p76
      %p78 = scmp.ne.s32.totalorder %s64, %s65
      %p79 = scmp.eq.s32.totalorder %s36, 1
      %p80 = por %p78, %p79
      %p82 = scmp.ne.s32.totalorder %s65, %s81
      %p83 = scmp.eq.s32.totalorder %s36, 0
      %p84 = por %p82, %p83
      %s85 = ssub.s32 %s30, %s37
      %p86 = scmp.eq.s32.totalorder %s85, 0
      %s88 = sadd.s32 %s87, 1
      %s89 = scalar_select %p86, %s87, %s88
      %p92 = pneg %p86
      %p93 = scmp.eq.s32.totalorder %s30, 1
      %p94 = por %p92, %p93
      %p95 = scmp.ne.s32.totalorder %s87, %s90
      %p96 = scmp.eq.s32.totalorder %s30, 0
      %p97 = por %p95, %p96
      %p98 = scmp.ne.s32.totalorder %s87, %s90
      %p99 = scmp.eq.s32.totalorder %s35, 1
      %p100 = por %p98, %p99
      %p101 = scmp.ne.s32.totalorder %s90, %s91
      %p102 = scmp.eq.s32.totalorder %s35, 0
      %p103 = por %p101, %p102
      %p104 = scmp.ne.s32.totalorder %s90, %s91
      %p105 = scmp.eq.s32.totalorder %s36, 1
      %p106 = por %p104, %p105
      %p108 = scmp.ne.s32.totalorder %s91, %s107
      %p109 = scmp.eq.s32.totalorder %s36, 0
      %p110 = por %p108, %p109
      %p111 = scmp.le.s32.totalorder 1, %s30
      %p112 = scmp.lt.s32.totalorder %s30, 3
      %p113 = pnand %p111, %p112
      %p114 = pneg %p113
      // Predicated region
      $region9: #{tpu_custom_call.1} parent=5 // pred_check
        _
      $region10: #{tpu_custom_call.1} parent=5 // pred_check_branch
        %116 = sbr.rel (%p113) target = $region12
      $region11: #{tpu_custom_call.1} parent=5 // pred_region
        %s117 = ssub.s32 %s30, 1
        // Predicated region
        $region13: #{tpu_custom_call.1} parent=11 // pred_check
          %p118 = pneg %p51
        $region14: #{tpu_custom_call.1} parent=11 // pred_check_branch
          %120 = sbr.rel (%p118) target = $region16
        $region15: #{tpu_custom_call.1} parent=11 // pred_region
          %s122 = ssub.s32 512, 512
          %123 = vsyncadd [#allocation7], %s122
          %s124 = sshll.u32 [#allocation6], 4
          %s125 = int_to_ptr.vmem [resolvable:$true] %s124
          %130 = dma.hbm_to_vmem [thread:$0]  %s3, 512, %s125, [#allocation7], 256, 256, 16
        $region16: #{tpu_custom_call.1} parent=11 // pred_fallthru
          _
      $region12: #{tpu_custom_call.1} parent=5 // pred_fallthru
        _
      %p131 = scmp.lt.s32.totalorder %s30, 2
      // Predicated region
      $region17: #{tpu_custom_call.1} parent=5 // pred_check
        %p132 = pneg %p131
      $region18: #{tpu_custom_call.1} parent=5 // pred_check_branch
        %134 = sbr.rel (%p132) target = $region20
      $region19: #{tpu_custom_call.1} parent=5 // pred_region
        // Predicated region
        $region21: #{tpu_custom_call.1} parent=19 // pred_check
          %p135 = pneg %p71
        $region22: #{tpu_custom_call.1} parent=19 // pred_check_branch
          %137 = sbr.rel (%p135) target = $region24
        $region23: #{tpu_custom_call.1} parent=19 // pred_region
          %s138 = sand.u32 %s61, 1
          %s139 = scalar_lea.sflag [#allocation10], %s138
          %s140 = sand.u32 %s61, 1
          %s141 = smul.addr %s140, 64
          %s142 = scalar_lea.vmem [#allocation9], %s141
          %s144 = ssub.s32 1024, 1024
          %145 = vsyncadd %s139, %s144
          %s146 = smul.addr %s30, 8
          %s147 = smul.addr %s146, 128
          %s148 = scalar_lea.hbm %s4, %s147
          %s150 = sshll.u32 %s142, 4
          %s151 = int_to_ptr.vmem [resolvable:$true] %s150
          %153 = dma.hbm_to_vmem [thread:$0]  %s148, 1024, %s151, %s139
        $region24: #{tpu_custom_call.1} parent=19 // pred_fallthru
          _
      $region20: #{tpu_custom_call.1} parent=5 // pred_fallthru
        _
      %p154 = scmp.le.s32.totalorder 1, %s30
      %p155 = scmp.lt.s32.totalorder %s30, 3
      %p156 = pnand %p154, %p155
      %p157 = pneg %p156
      // Predicated region
      $region25: #{tpu_custom_call.1} parent=5 // pred_check
        _
      $region26: #{tpu_custom_call.1} parent=5 // pred_check_branch
        %159 = sbr.rel (%p156) target = $region28
      $region27: #{tpu_custom_call.1} parent=5 // pred_region
        %s160 = ssub.s32 %s30, 1
        // Predicated region
        $region29: #{tpu_custom_call.1} parent=27 // pred_check
          %p161 = pneg %p51
        $region30: #{tpu_custom_call.1} parent=27 // pred_check_branch
          %163 = sbr.rel (%p161) target = $region32
        $region31: #{tpu_custom_call.1} parent=27 // pred_region
          %164 = dma.done [#allocation7], 512
        $region32: #{tpu_custom_call.1} parent=27 // pred_fallthru
          _
        %s165 = sand.u32 %s64, 1
        %s166 = scalar_lea.sflag [#allocation10], %s165
        %s167 = sand.u32 %s64, 1
        %s168 = smul.addr %s167, 64
        %s169 = scalar_lea.vmem [#allocation9], %s168
        // Predicated region
        $region33: #{tpu_custom_call.1} parent=27 // pred_check
          %p170 = pneg %p77
        $region34: #{tpu_custom_call.1} parent=27 // pred_check_branch
          %172 = sbr.rel (%p170) target = $region36
        $region35: #{tpu_custom_call.1} parent=27 // pred_region
          %173 = dma.done %s166, 1024
        $region36: #{tpu_custom_call.1} parent=27 // pred_fallthru
          _
        %p174 = pneg %p51
        %p175 = pneg %p48
        %s176 = sand.u32 %s64, 1
        %s177 = scalar_lea.sflag [#allocation10], %s176
        %s178 = sand.u32 %s64, 1
        %s179 = smul.addr %s178, 64
        %s180 = scalar_lea.vmem [#allocation9], %s179
        %p181 = pneg %p77
        %p182 = pneg %p74
        %p183 = pneg %p103
        %p184 = pneg %p100
        %s185 = sand.u32 %s90, 1
        %s186 = scalar_lea.sflag [#allocation8], %s185
        %s187 = sand.u32 %s90, 1
        %s188 = smul.addr %s187, 16
        %s189 = scalar_lea.vmem [#allocation11], %s188
        %v190 = vld [vmem:[%s169] sm:$0xff]
        %v191 = vld [vmem:[%s169 + $0x8] sm:$0xff]
        %v192 = vld [vmem:[%s169 + $0x10] sm:$0xff]
        %v193 = vld [vmem:[%s169 + $0x18] sm:$0xff]
        %v194 = vld [vmem:[%s169 + $0x20] sm:$0xff]
        %v195 = vld [vmem:[%s169 + $0x28] sm:$0xff]
        %v196 = vld [vmem:[%s169 + $0x30] sm:$0xff]
        %v197 = vld [vmem:[%s169 + $0x38] sm:$0xff]
        %v198 = vadd.f32 %v190, %v192
        %v199 = vadd.f32 %v191, %v193
        %v200 = vadd.f32 %v198, %v194
        %v201 = vadd.f32 %v199, %v195
        %v202 = vadd.f32 %v200, %v196
        %v203 = vadd.f32 %v201, %v197
        %v204 = vmul.f32 %v202, 0.25
        %v205 = vmul.f32 %v203, 0.25
        %v206 = vld [vmem:[#allocation6] ss:$8 sm:$0x3]
        %s207 = scalar_lea.vmem [#allocation6], 1
        %v208 = vld [vmem:[%s207] ss:$8 sm:$0x3]
        %s209 = scalar_lea.vmem [#allocation6], 2
        %v210 = vld [vmem:[%s209] ss:$8 sm:$0x3]
        %s211 = scalar_lea.vmem [#allocation6], 3
        %v212 = vld [vmem:[%s211] ss:$8 sm:$0x3]
        %s213 = scalar_lea.vmem [#allocation6], 5
        %v214 = vld [vmem:[%s213] ss:$8 sm:$0x3]
        %s215 = scalar_lea.vmem [#allocation6], 6
        %v216 = vld [vmem:[%s215] ss:$8 sm:$0x3]
        %s217 = scalar_lea.vmem [#allocation6], 7
        %v218 = vld [vmem:[%s217] ss:$8 sm:$0x3]
        %s219 = scalar_lea.vmem [#allocation6], 16
        %v220 = vld [vmem:[%s219] ss:$8 sm:$0x3]
        %s221 = sld [smem:[#allocation3]]
        %v222 = vstv %s221
        %v223 = vmul.f32 %v190, %v222
        %v224 = vmul.f32 %v191, %v222
        %s225 = sld [smem:[#allocation3 + $0x9]]
        %v226 = vstv %s225
        %v227 = vmul.f32 %v192, %v226
        %v228 = vmul.f32 %v193, %v226
        %v229 = vadd.f32 %v223, %v227
        %v230 = vadd.f32 %v224, %v228
        %s231 = sld [smem:[#allocation3 + $0x12]]
        %v232 = vstv %s231
        %v233 = vmul.f32 %v194, %v232
        %v234 = vmul.f32 %v195, %v232
        %v235 = vadd.f32 %v229, %v233
        %v236 = vadd.f32 %v230, %v234
        %s237 = sld [smem:[#allocation3 + $0x1b]]
        %v238 = vstv %s237
        %v239 = vmul.f32 %v196, %v238
        %v240 = vmul.f32 %v197, %v238
        %v241 = vadd.f32 %v235, %v239
        %v242 = vadd.f32 %v236, %v240
        %s243 = sld [smem:[#allocation4]]
        %v244 = vstv %s243
        %v245 = vmul.f32 %v204, %v244
        %v246 = vmul.f32 %v205, %v244
        %v247 = vsub.f32 %v241, %v245
        %v248 = vsub.f32 %v242, %v246
        %249 = vrot.lane.b32.xlu0 %v247, 17
        %v250 = vpop.permute.xlu0 %249
        %251 = vrot.lane.b32.xlu0 %v248, 17
        %v252 = vpop.permute.xlu0 %251
        %v253 = vlaneseq
        %v254 = vand.u32 %v253, 127
        %vm255 = vcmp.lt.s32.totalorder %v254, 17
        %v256 = vsel %vm255, %v250, %v252
        %v257 = vsel %vm255, %v252, %v250
        %v259 = vlaneseq
        %v260 = vshrl.u32 %v259, 7
        %v261 = vsub.s32 0, %v260
        %v262 = vrot.slane %v206, %v261
        %v263 = vlaneseq
        %v264 = vshrl.u32 %v263, 7
        %v265 = vsub.s32 1, %v264
        %v266 = vrot.slane %v206, %v265
        %v269 = vmul.f32 %v257, %v262
        %v270 = vmul.f32 %v256, %v266
        %s271 = sld [smem:[#allocation3 + $0x1]]
        %v272 = vstv %s271
        %v273 = vmul.f32 %v190, %v272
        %v274 = vmul.f32 %v191, %v272
        %s275 = sld [smem:[#allocation3 + $0xa]]
        %v276 = vstv %s275
        %v277 = vmul.f32 %v192, %v276
        %v278 = vmul.f32 %v193, %v276
        %v279 = vadd.f32 %v273, %v277
        %v280 = vadd.f32 %v274, %v278
        %s281 = sld [smem:[#allocation3 + $0x13]]
        %v282 = vstv %s281
        %v283 = vmul.f32 %v194, %v282
        %v284 = vmul.f32 %v195, %v282
        %v285 = vadd.f32 %v279, %v283
        %v286 = vadd.f32 %v280, %v284
        %s287 = sld [smem:[#allocation3 + $0x1c]]
        %v288 = vstv %s287
        %v289 = vmul.f32 %v196, %v288
        %v290 = vmul.f32 %v197, %v288
        %v291 = vadd.f32 %v285, %v289
        %v292 = vadd.f32 %v286, %v290
        %s293 = sld [smem:[#allocation4 + $0x1]]
        %v294 = vstv %s293
        %v295 = vmul.f32 %v204, %v294
        %v296 = vmul.f32 %v205, %v294
        %v297 = vsub.f32 %v291, %v295
        %v298 = vsub.f32 %v292, %v296
        %299 = vrot.lane.b32.xlu0 %v297, 16
        %v300 = vpop.permute.xlu0 %299
        %301 = vrot.lane.b32.xlu0 %v298, 16
        %v302 = vpop.permute.xlu0 %301
        %vm303 = vcmp.lt.s32.totalorder %v254, 16
        %v304 = vsel %vm303, %v300, %v302
        %v305 = vsel %vm303, %v302, %v300
        %v307 = vlaneseq
        %v308 = vshrl.u32 %v307, 7
        %v309 = vsub.s32 0, %v308
        %v310 = vrot.slane %v208, %v309
        %v311 = vlaneseq
        %v312 = vshrl.u32 %v311, 7
        %v313 = vsub.s32 1, %v312
        %v314 = vrot.slane %v208, %v313
        %v317 = vmul.f32 %v305, %v310
        %v318 = vmul.f32 %v304, %v314
        %s319 = sld [smem:[#allocation3 + $0x2]]
        %v320 = vstv %s319
        %v321 = vmul.f32 %v190, %v320
        %v322 = vmul.f32 %v191, %v320
        %s323 = sld [smem:[#allocation3 + $0xb]]
        %v324 = vstv %s323
        %v325 = vmul.f32 %v192, %v324
        %v326 = vmul.f32 %v193, %v324
        %v327 = vadd.f32 %v321, %v325
        %v328 = vadd.f32 %v322, %v326
        %s329 = sld [smem:[#allocation3 + $0x14]]
        %v330 = vstv %s329
        %v331 = vmul.f32 %v194, %v330
        %v332 = vmul.f32 %v195, %v330
        %v333 = vadd.f32 %v327, %v331
        %v334 = vadd.f32 %v328, %v332
        %s335 = sld [smem:[#allocation3 + $0x1d]]
        %v336 = vstv %s335
        %v337 = vmul.f32 %v196, %v336
        %v338 = vmul.f32 %v197, %v336
        %v339 = vadd.f32 %v333, %v337
        %v340 = vadd.f32 %v334, %v338
        %s341 = sld [smem:[#allocation4 + $0x2]]
        %v342 = vstv %s341
        %v343 = vmul.f32 %v204, %v342
        %v344 = vmul.f32 %v205, %v342
        %v345 = vsub.f32 %v339, %v343
        %v346 = vsub.f32 %v340, %v344
        %347 = vrot.lane.b32.xlu0 %v345, 15
        %v348 = vpop.permute.xlu0 %347
        %349 = vrot.lane.b32.xlu0 %v346, 15
        %v350 = vpop.permute.xlu0 %349
        %vm351 = vcmp.lt.s32.totalorder %v254, 15
        %v352 = vsel %vm351, %v348, %v350
        %v353 = vsel %vm351, %v350, %v348
        %v355 = vlaneseq
        %v356 = vshrl.u32 %v355, 7
        %v357 = vsub.s32 0, %v356
        %v358 = vrot.slane %v210, %v357
        %v359 = vlaneseq
        %v360 = vshrl.u32 %v359, 7
        %v361 = vsub.s32 1, %v360
        %v362 = vrot.slane %v210, %v361
        %v365 = vmul.f32 %v353, %v358
        %v366 = vmul.f32 %v352, %v362
        %v367 = vadd.f32 %v269, %v365
        %v368 = vadd.f32 %v270, %v366
        %s369 = sld [smem:[#allocation3 + $0x3]]
        %v370 = vstv %s369
        %v371 = vmul.f32 %v190, %v370
        %v372 = vmul.f32 %v191, %v370
        %s373 = sld [smem:[#allocation3 + $0xc]]
        %v374 = vstv %s373
        %v375 = vmul.f32 %v192, %v374
        %v376 = vmul.f32 %v193, %v374
        %v377 = vadd.f32 %v371, %v375
        %v378 = vadd.f32 %v372, %v376
        %s379 = sld [smem:[#allocation3 + $0x15]]
        %v380 = vstv %s379
        %v381 = vmul.f32 %v194, %v380
        %v382 = vmul.f32 %v195, %v380
        %v383 = vadd.f32 %v377, %v381
        %v384 = vadd.f32 %v378, %v382
        %s385 = sld [smem:[#allocation3 + $0x1e]]
        %v386 = vstv %s385
        %v387 = vmul.f32 %v196, %v386
        %v388 = vmul.f32 %v197, %v386
        %v389 = vadd.f32 %v383, %v387
        %v390 = vadd.f32 %v384, %v388
        %s391 = sld [smem:[#allocation4 + $0x3]]
        %v392 = vstv %s391
        %v393 = vmul.f32 %v204, %v392
        %v394 = vmul.f32 %v205, %v392
        %v395 = vsub.f32 %v389, %v393
        %v396 = vsub.f32 %v390, %v394
        %397 = vrot.lane.b32.xlu0 %v395, 1
        %v398 = vpop.permute.xlu0 %397
        %399 = vrot.lane.b32.xlu0 %v396, 1
        %v400 = vpop.permute.xlu0 %399
        %vm401 = vcmp.lt.s32.totalorder %v254, 1
        %v402 = vsel %vm401, %v398, %v400
        %v403 = vsel %vm401, %v400, %v398
        %v405 = vlaneseq
        %v406 = vshrl.u32 %v405, 7
        %v407 = vsub.s32 0, %v406
        %v408 = vrot.slane %v212, %v407
        %v409 = vlaneseq
        %v410 = vshrl.u32 %v409, 7
        %v411 = vsub.s32 1, %v410
        %v412 = vrot.slane %v212, %v411
        %v415 = vmul.f32 %v403, %v408
        %v416 = vmul.f32 %v402, %v412
        %v417 = vadd.f32 %v317, %v415
        %v418 = vadd.f32 %v318, %v416
        %s419 = sld [smem:[#allocation3 + $0x4]]
        %v420 = vstv %s419
        %v421 = vmul.f32 %v190, %v420
        %v422 = vmul.f32 %v191, %v420
        %s423 = sld [smem:[#allocation3 + $0xd]]
        %v424 = vstv %s423
        %v425 = vmul.f32 %v192, %v424
        %v426 = vmul.f32 %v193, %v424
        %v427 = vadd.f32 %v421, %v425
        %v428 = vadd.f32 %v422, %v426
        %s429 = sld [smem:[#allocation3 + $0x16]]
        %v430 = vstv %s429
        %v431 = vmul.f32 %v194, %v430
        %v432 = vmul.f32 %v195, %v430
        %v433 = vadd.f32 %v427, %v431
        %v434 = vadd.f32 %v428, %v432
        %s435 = sld [smem:[#allocation3 + $0x1f]]
        %v436 = vstv %s435
        %v437 = vmul.f32 %v196, %v436
        %v438 = vmul.f32 %v197, %v436
        %v439 = vadd.f32 %v433, %v437
        %v440 = vadd.f32 %v434, %v438
        %s441 = sld [smem:[#allocation4 + $0x4]]
        %v442 = vstv %s441
        %v443 = vmul.f32 %v204, %v442
        %v444 = vmul.f32 %v205, %v442
        %v445 = vsub.f32 %v439, %v443
        %v446 = vsub.f32 %v440, %v444
        %v447 = vadd.f32 %v367, %v445
        %v448 = vadd.f32 %v368, %v446
        %s449 = sld [smem:[#allocation3 + $0x5]]
        %v450 = vstv %s449
        %v451 = vmul.f32 %v190, %v450
        %v452 = vmul.f32 %v191, %v450
        %s453 = sld [smem:[#allocation3 + $0xe]]
        %v454 = vstv %s453
        %v455 = vmul.f32 %v192, %v454
        %v456 = vmul.f32 %v193, %v454
        %v457 = vadd.f32 %v451, %v455
        %v458 = vadd.f32 %v452, %v456
        %s459 = sld [smem:[#allocation3 + $0x17]]
        %v460 = vstv %s459
        %v461 = vmul.f32 %v194, %v460
        %v462 = vmul.f32 %v195, %v460
        %v463 = vadd.f32 %v457, %v461
        %v464 = vadd.f32 %v458, %v462
        %s465 = sld [smem:[#allocation3 + $0x20]]
        %v466 = vstv %s465
        %v467 = vmul.f32 %v196, %v466
        %v468 = vmul.f32 %v197, %v466
        %v469 = vadd.f32 %v463, %v467
        %v470 = vadd.f32 %v464, %v468
        %s471 = sld [smem:[#allocation4 + $0x5]]
        %v472 = vstv %s471
        %v473 = vmul.f32 %v204, %v472
        %v474 = vmul.f32 %v205, %v472
        %v475 = vsub.f32 %v469, %v473
        %v476 = vsub.f32 %v470, %v474
        %477 = vrot.lane.b32.xlu0 %v475, 127
        %v478 = vpop.permute.xlu0 %477
        %479 = vrot.lane.b32.xlu0 %v476, 127
        %v480 = vpop.permute.xlu0 %479
        %vm481 = vcmp.lt.s32.totalorder %v254, 127
        %v482 = vsel %vm481, %v478, %v480
        %v483 = vsel %vm481, %v480, %v478
        %v485 = vlaneseq
        %v486 = vshrl.u32 %v485, 7
        %v487 = vsub.s32 0, %v486
        %v488 = vrot.slane %v214, %v487
        %v489 = vlaneseq
        %v490 = vshrl.u32 %v489, 7
        %v491 = vsub.s32 1, %v490
        %v492 = vrot.slane %v214, %v491
        %v495 = vmul.f32 %v482, %v488
        %v496 = vmul.f32 %v483, %v492
        %v497 = vadd.f32 %v417, %v495
        %v498 = vadd.f32 %v418, %v496
        %s499 = sld [smem:[#allocation3 + $0x6]]
        %v500 = vstv %s499
        %v501 = vmul.f32 %v190, %v500
        %v502 = vmul.f32 %v191, %v500
        %s503 = sld [smem:[#allocation3 + $0xf]]
        %v504 = vstv %s503
        %v505 = vmul.f32 %v192, %v504
        %v506 = vmul.f32 %v193, %v504
        %v507 = vadd.f32 %v501, %v505
        %v508 = vadd.f32 %v502, %v506
        %s509 = sld [smem:[#allocation3 + $0x18]]
        %v510 = vstv %s509
        %v511 = vmul.f32 %v194, %v510
        %v512 = vmul.f32 %v195, %v510
        %v513 = vadd.f32 %v507, %v511
        %v514 = vadd.f32 %v508, %v512
        %s515 = sld [smem:[#allocation3 + $0x21]]
        %v516 = vstv %s515
        %v517 = vmul.f32 %v196, %v516
        %v518 = vmul.f32 %v197, %v516
        %v519 = vadd.f32 %v513, %v517
        %v520 = vadd.f32 %v514, %v518
        %s521 = sld [smem:[#allocation4 + $0x6]]
        %v522 = vstv %s521
        %v523 = vmul.f32 %v204, %v522
        %v524 = vmul.f32 %v205, %v522
        %v525 = vsub.f32 %v519, %v523
        %v526 = vsub.f32 %v520, %v524
        %527 = vrot.lane.b32.xlu0 %v525, 113
        %v528 = vpop.permute.xlu0 %527
        %529 = vrot.lane.b32.xlu0 %v526, 113
        %v530 = vpop.permute.xlu0 %529
        %vm531 = vcmp.lt.s32.totalorder %v254, 113
        %v532 = vsel %vm531, %v528, %v530
        %v533 = vsel %vm531, %v530, %v528
        %v535 = vlaneseq
        %v536 = vshrl.u32 %v535, 7
        %v537 = vsub.s32 0, %v536
        %v538 = vrot.slane %v216, %v537
        %v539 = vlaneseq
        %v540 = vshrl.u32 %v539, 7
        %v541 = vsub.s32 1, %v540
        %v542 = vrot.slane %v216, %v541
        %v545 = vmul.f32 %v532, %v538
        %v546 = vmul.f32 %v533, %v542
        %v547 = vadd.f32 %v447, %v545
        %v548 = vadd.f32 %v448, %v546
        %s549 = sld [smem:[#allocation3 + $0x7]]
        %v550 = vstv %s549
        %v551 = vmul.f32 %v190, %v550
        %v552 = vmul.f32 %v191, %v550
        %s553 = sld [smem:[#allocation3 + $0x10]]
        %v554 = vstv %s553
        %v555 = vmul.f32 %v192, %v554
        %v556 = vmul.f32 %v193, %v554
        %v557 = vadd.f32 %v551, %v555
        %v558 = vadd.f32 %v552, %v556
        %s559 = sld [smem:[#allocation3 + $0x19]]
        %v560 = vstv %s559
        %v561 = vmul.f32 %v194, %v560
        %v562 = vmul.f32 %v195, %v560
        %v563 = vadd.f32 %v557, %v561
        %v564 = vadd.f32 %v558, %v562
        %s565 = sld [smem:[#allocation3 + $0x22]]
        %v566 = vstv %s565
        %v567 = vmul.f32 %v196, %v566
        %v568 = vmul.f32 %v197, %v566
        %v569 = vadd.f32 %v563, %v567
        %v570 = vadd.f32 %v564, %v568
        %s571 = sld [smem:[#allocation4 + $0x7]]
        %v572 = vstv %s571
        %v573 = vmul.f32 %v204, %v572
        %v574 = vmul.f32 %v205, %v572
        %v575 = vsub.f32 %v569, %v573
        %v576 = vsub.f32 %v570, %v574
        %577 = vrot.lane.b32.xlu0 %v575, 112
        %v578 = vpop.permute.xlu0 %577
        %579 = vrot.lane.b32.xlu0 %v576, 112
        %v580 = vpop.permute.xlu0 %579
        %vm581 = vcmp.lt.s32.totalorder %v254, 112
        %v582 = vsel %vm581, %v578, %v580
        %v583 = vsel %vm581, %v580, %v578
        %v585 = vlaneseq
        %v586 = vshrl.u32 %v585, 7
        %v587 = vsub.s32 0, %v586
        %v588 = vrot.slane %v218, %v587
        %v589 = vlaneseq
        %v590 = vshrl.u32 %v589, 7
        %v591 = vsub.s32 1, %v590
        %v592 = vrot.slane %v218, %v591
        %v595 = vmul.f32 %v582, %v588
        %v596 = vmul.f32 %v583, %v592
        %v597 = vadd.f32 %v497, %v595
        %v598 = vadd.f32 %v498, %v596
        %s599 = sld [smem:[#allocation3 + $0x8]]
        %v600 = vstv %s599
        %v601 = vmul.f32 %v190, %v600
        %v602 = vmul.f32 %v191, %v600
        %s603 = sld [smem:[#allocation3 + $0x11]]
        %v604 = vstv %s603
        %v605 = vmul.f32 %v192, %v604
        %v606 = vmul.f32 %v193, %v604
        %v607 = vadd.f32 %v601, %v605
        %v608 = vadd.f32 %v602, %v606
        %s609 = sld [smem:[#allocation3 + $0x1a]]
        %v610 = vstv %s609
        %v611 = vmul.f32 %v194, %v610
        %v612 = vmul.f32 %v195, %v610
        %v613 = vadd.f32 %v607, %v611
        %v614 = vadd.f32 %v608, %v612
        %s615 = sld [smem:[#allocation3 + $0x23]]
        %v616 = vstv %s615
        %v617 = vmul.f32 %v196, %v616
        %v618 = vmul.f32 %v197, %v616
        %v619 = vadd.f32 %v613, %v617
        %v620 = vadd.f32 %v614, %v618
        %s621 = sld [smem:[#allocation4 + $0x8]]
        %v622 = vstv %s621
        %v623 = vmul.f32 %v204, %v622
        %v624 = vmul.f32 %v205, %v622
        %v625 = vsub.f32 %v619, %v623
        %v626 = vsub.f32 %v620, %v624
        %627 = vrot.lane.b32.xlu0 %v625, 111
        %v628 = vpop.permute.xlu0 %627
        %629 = vrot.lane.b32.xlu0 %v626, 111
        %v630 = vpop.permute.xlu0 %629
        %vm631 = vcmp.lt.s32.totalorder %v254, 111
        %v632 = vsel %vm631, %v628, %v630
        %v633 = vsel %vm631, %v630, %v628
        %v635 = vlaneseq
        %v636 = vshrl.u32 %v635, 7
        %v637 = vsub.s32 0, %v636
        %v638 = vrot.slane %v220, %v637
        %v639 = vlaneseq
        %v640 = vshrl.u32 %v639, 7
        %v641 = vsub.s32 1, %v640
        %v642 = vrot.slane %v220, %v641
        %v645 = vmul.f32 %v632, %v638
        %v646 = vmul.f32 %v633, %v642
        %v647 = vadd.f32 %v547, %v645
        %v648 = vadd.f32 %v548, %v646
        %v649 = vadd.f32 %v647, %v597
        %v650 = vadd.f32 %v648, %v598
        %s651 = sld [smem:[#allocation5]]
        %v652 = vstv %s651
        %v653 = vmul.f32 %v649, %v652
        %v654 = vmul.f32 %v650, %v652
        %s655 = sld [smem:[#allocation5 + $0x9]]
        %v656 = vstv %s655
        %v657 = vmul.f32 %v204, %v656
        %v658 = vmul.f32 %v205, %v656
        %v659 = vadd.f32 %v653, %v657
        %v660 = vadd.f32 %v654, %v658
        %661 = vrot.lane.b32.xlu0 %v659, 17
        %v662 = vpop.permute.xlu0 %661
        %663 = vrot.lane.b32.xlu0 %v660, 17
        %v664 = vpop.permute.xlu0 %663
        %v665 = vsel %vm255, %v662, %v664
        %v666 = vsel %vm255, %v664, %v662
        %v667 = vmul.f32 %v666, %v262
        %v668 = vmul.f32 %v665, %v266
        %s669 = sld [smem:[#allocation5 + $0x1]]
        %v670 = vstv %s669
        %v671 = vmul.f32 %v649, %v670
        %v672 = vmul.f32 %v650, %v670
        %s673 = sld [smem:[#allocation5 + $0xa]]
        %v674 = vstv %s673
        %v675 = vmul.f32 %v204, %v674
        %v676 = vmul.f32 %v205, %v674
        %v677 = vadd.f32 %v671, %v675
        %v678 = vadd.f32 %v672, %v676
        %679 = vrot.lane.b32.xlu0 %v677, 16
        %v680 = vpop.permute.xlu0 %679
        %681 = vrot.lane.b32.xlu0 %v678, 16
        %v682 = vpop.permute.xlu0 %681
        %v683 = vsel %vm303, %v680, %v682
        %v684 = vsel %vm303, %v682, %v680
        %v685 = vmul.f32 %v684, %v310
        %v686 = vmul.f32 %v683, %v314
        %s687 = sld [smem:[#allocation5 + $0x2]]
        %v688 = vstv %s687
        %v689 = vmul.f32 %v649, %v688
        %v690 = vmul.f32 %v650, %v688
        %s691 = sld [smem:[#allocation5 + $0xb]]
        %v692 = vstv %s691
        %v693 = vmul.f32 %v204, %v692
        %v694 = vmul.f32 %v205, %v692
        %v695 = vadd.f32 %v689, %v693
        %v696 = vadd.f32 %v690, %v694
        %697 = vrot.lane.b32.xlu0 %v695, 15
        %v698 = vpop.permute.xlu0 %697
        %699 = vrot.lane.b32.xlu0 %v696, 15
        %v700 = vpop.permute.xlu0 %699
        %v701 = vsel %vm351, %v698, %v700
        %v702 = vsel %vm351, %v700, %v698
        %v703 = vmul.f32 %v702, %v358
        %v704 = vmul.f32 %v701, %v362
        %v705 = vadd.f32 %v667, %v703
        %v706 = vadd.f32 %v668, %v704
        %s707 = sld [smem:[#allocation5 + $0x3]]
        %v708 = vstv %s707
        %v709 = vmul.f32 %v649, %v708
        %v710 = vmul.f32 %v650, %v708
        %s711 = sld [smem:[#allocation5 + $0xc]]
        %v712 = vstv %s711
        %v713 = vmul.f32 %v204, %v712
        %v714 = vmul.f32 %v205, %v712
        %v715 = vadd.f32 %v709, %v713
        %v716 = vadd.f32 %v710, %v714
        %717 = vrot.lane.b32.xlu0 %v715, 1
        %v718 = vpop.permute.xlu0 %717
        %719 = vrot.lane.b32.xlu0 %v716, 1
        %v720 = vpop.permute.xlu0 %719
        %v721 = vsel %vm401, %v718, %v720
        %v722 = vsel %vm401, %v720, %v718
        %v723 = vmul.f32 %v722, %v408
        %v724 = vmul.f32 %v721, %v412
        %v725 = vadd.f32 %v685, %v723
        %v726 = vadd.f32 %v686, %v724
        %s727 = sld [smem:[#allocation5 + $0x4]]
        %v728 = vstv %s727
        %v729 = vmul.f32 %v649, %v728
        %v730 = vmul.f32 %v650, %v728
        %s731 = sld [smem:[#allocation5 + $0xd]]
        %v732 = vstv %s731
        %v733 = vmul.f32 %v204, %v732
        %v734 = vmul.f32 %v205, %v732
        %v735 = vadd.f32 %v729, %v733
        %v736 = vadd.f32 %v730, %v734
        %v737 = vadd.f32 %v705, %v735
        %v738 = vadd.f32 %v706, %v736
        %s739 = sld [smem:[#allocation5 + $0x5]]
        %v740 = vstv %s739
        %v741 = vmul.f32 %v649, %v740
        %v742 = vmul.f32 %v650, %v740
        %s743 = sld [smem:[#allocation5 + $0xe]]
        %v744 = vstv %s743
        %v745 = vmul.f32 %v204, %v744
        %v746 = vmul.f32 %v205, %v744
        %v747 = vadd.f32 %v741, %v745
        %v748 = vadd.f32 %v742, %v746
        %749 = vrot.lane.b32.xlu0 %v747, 127
        %v750 = vpop.permute.xlu0 %749
        %751 = vrot.lane.b32.xlu0 %v748, 127
        %v752 = vpop.permute.xlu0 %751
        %v753 = vsel %vm481, %v750, %v752
        %v754 = vsel %vm481, %v752, %v750
        %v755 = vmul.f32 %v753, %v488
        %v756 = vmul.f32 %v754, %v492
        %v757 = vadd.f32 %v725, %v755
        %v758 = vadd.f32 %v726, %v756
        %s759 = sld [smem:[#allocation5 + $0x6]]
        %v760 = vstv %s759
        %v761 = vmul.f32 %v649, %v760
        %v762 = vmul.f32 %v650, %v760
        %s763 = sld [smem:[#allocation5 + $0xf]]
        %v764 = vstv %s763
        %v765 = vmul.f32 %v204, %v764
        %v766 = vmul.f32 %v205, %v764
        %v767 = vadd.f32 %v761, %v765
        %v768 = vadd.f32 %v762, %v766
        %769 = vrot.lane.b32.xlu0 %v767, 113
        %v770 = vpop.permute.xlu0 %769
        %771 = vrot.lane.b32.xlu0 %v768, 113
        %v772 = vpop.permute.xlu0 %771
        %v773 = vsel %vm531, %v770, %v772
        %v774 = vsel %vm531, %v772, %v770
        %v775 = vmul.f32 %v773, %v538
        %v776 = vmul.f32 %v774, %v542
        %v777 = vadd.f32 %v737, %v775
        %v778 = vadd.f32 %v738, %v776
        %s779 = sld [smem:[#allocation5 + $0x7]]
        %v780 = vstv %s779
        %v781 = vmul.f32 %v649, %v780
        %v782 = vmul.f32 %v650, %v780
        %s783 = sld [smem:[#allocation5 + $0x10]]
        %v784 = vstv %s783
        %v785 = vmul.f32 %v204, %v784
        %v786 = vmul.f32 %v205, %v784
        %v787 = vadd.f32 %v781, %v785
        %v788 = vadd.f32 %v782, %v786
        %789 = vrot.lane.b32.xlu0 %v787, 112
        %v790 = vpop.permute.xlu0 %789
        %791 = vrot.lane.b32.xlu0 %v788, 112
        %v792 = vpop.permute.xlu0 %791
        %v793 = vsel %vm581, %v790, %v792
        %v794 = vsel %vm581, %v792, %v790
        %v795 = vmul.f32 %v793, %v588
        %v796 = vmul.f32 %v794, %v592
        %v797 = vadd.f32 %v757, %v795
        %v798 = vadd.f32 %v758, %v796
        %s799 = sld [smem:[#allocation5 + $0x8]]
        %v800 = vstv %s799
        %v801 = vmul.f32 %v649, %v800
        %v802 = vmul.f32 %v650, %v800
        %s803 = sld [smem:[#allocation5 + $0x11]]
        %v804 = vstv %s803
        %v805 = vmul.f32 %v204, %v804
        %v806 = vmul.f32 %v205, %v804
        %v807 = vadd.f32 %v801, %v805
        %v808 = vadd.f32 %v802, %v806
        %809 = vrot.lane.b32.xlu0 %v807, 111
        %v810 = vpop.permute.xlu0 %809
        %811 = vrot.lane.b32.xlu0 %v808, 111
        %v812 = vpop.permute.xlu0 %811
        %v813 = vsel %vm631, %v810, %v812
        %v814 = vsel %vm631, %v812, %v810
        %v815 = vmul.f32 %v813, %v638
        %v816 = vmul.f32 %v814, %v642
        %v817 = vadd.f32 %v777, %v815
        %v818 = vadd.f32 %v778, %v816
        %v819 = vadd.f32 %v817, %v797
        %v820 = vadd.f32 %v818, %v798
        %v821 = vsub.f32 0.0, %v819
        %v822 = vsub.f32 0.0, %v820
        %v823 = vmul.f32 %v821, 1.442695
        %v824 = vpow.pop %v823
        %v825 = vmul.f32 %v822, 1.442695
        %v826 = vpow.pop %v825
        %v827 = vadd.f32 %v824, 1.0
        %v828 = vadd.f32 %v826, 1.0
        %v829 = vrcp.pop %v827
        %v830 = vrcp.pop %v828
        %831 = vst [vmem:[%s189] sm:$0xff] %v829
        %832 = vst [vmem:[%s189 + $0x8] sm:$0xff] %v830
        %s833 = sand.u32 %s90, 1
        %s834 = scalar_lea.sflag [#allocation8], %s833
        %s835 = sand.u32 %s90, 1
        %s836 = smul.addr %s835, 16
        %s837 = scalar_lea.vmem [#allocation11], %s836
        // Predicated region
        $region37: #{tpu_custom_call.1} parent=27 // pred_check
          %p838 = pneg %p100
        $region38: #{tpu_custom_call.1} parent=27 // pred_check_branch
          %840 = sbr.rel (%p838) target = $region40
        $region39: #{tpu_custom_call.1} parent=27 // pred_region
          %s842 = ssub.s32 256, 256
          %843 = vsyncadd %s834, %s842
          %s844 = smul.addr %s35, 2
          %s845 = smul.addr %s844, 128
          %s846 = scalar_lea.hbm %s5, %s845
          %s848 = sshll.u32 %s837, 4
          %s849 = int_to_ptr.vmem [resolvable:$true] %s848
          %851 = dma.vmem_to_hbm [thread:$0]  %s849, 256, %s846, %s834
        $region40: #{tpu_custom_call.1} parent=27 // pred_fallthru
          _
      $region28: #{tpu_custom_call.1} parent=5 // pred_fallthru
        _
      %p852 = scmp.le.s32.totalorder 2, %s30
      // Predicated region
      $region41: #{tpu_custom_call.1} parent=5 // pred_check
        %p853 = pneg %p852
      $region42: #{tpu_custom_call.1} parent=5 // pred_check_branch
        %855 = sbr.rel (%p853) target = $region44
      $region43: #{tpu_custom_call.1} parent=5 // pred_region
        %s856 = ssub.s32 %s30, 2
        // Predicated region
        $region45: #{tpu_custom_call.1} parent=43 // pred_check
          %p857 = pneg %p106
        $region46: #{tpu_custom_call.1} parent=43 // pred_check_branch
          %859 = sbr.rel (%p857) target = $region48
        $region47: #{tpu_custom_call.1} parent=43 // pred_region
          %s860 = sand.u32 %s91, 1
          %s861 = scalar_lea.sflag [#allocation8], %s860
          %s862 = sand.u32 %s91, 1
          %s863 = smul.addr %s862, 16
          %s864 = scalar_lea.vmem [#allocation11], %s863
          %865 = dma.done %s861, 256
        $region48: #{tpu_custom_call.1} parent=43 // pred_fallthru
          _
      $region44: #{tpu_custom_call.1} parent=5 // pred_fallthru
        _
    $region6: #{tpu_custom_call.1} parent=1 // loop_footer
      %s34 = sadd.s32 1, %s30
    $region7: #{tpu_custom_call.1} parent=1 // loop_footer_branch
      %29 = sbr.rel target = $region3
    $region8: #{tpu_custom_call.1} parent=1 // loop_exit
      _
    %866 = vsyncpa [#allocation7], 1
    %s867 = scalar_lea.sflag [#allocation7], 1
    %868 = vsyncpa %s867, 1
    %869 = vsyncpa [#allocation10], 1
    %s870 = scalar_lea.sflag [#allocation10], 1
    %871 = vsyncpa %s870, 1
    %872 = vsyncpa [#allocation8], 1
    %s873 = scalar_lea.sflag [#allocation8], 1
    %874 = vsyncpa %s873, 1

</llo_original>
